<compile_context>
chip_gen: v5e
topology: v5e:2x2
jax: 0.10.0
libtpu: 0.0.40
codegen_flags: <defaults>
</compile_context>

<pallas_src>
import functools

import jax
import jax.numpy as jnp
from jax.experimental import pallas as pl
from jax.experimental.pallas import tpu as pltpu


# ---------------------------------------------------------------------------
# Shared per-batch-row causal dilated conv tile: im2col + one MXU matmul.
# ---------------------------------------------------------------------------
def _conv_rows(xw_b, w, *, K, D, T):
    # xw_b: (C_in, pad + T) haloed input window (matmul dtype)
    # w   : (C_out, K * C_in) stacked-tap weights (matmul dtype)
    xcol = jnp.concatenate([xw_b[:, t * D: t * D + T] for t in range(K)], axis=0)
    return jnp.dot(w, xcol, preferred_element_type=jnp.float32)   # (C_out, T) f32


# ---------------------------------------------------------------------------
# Pass 1: per-tile channel sum / sum-of-squares of the (bias-free) conv output.
# ---------------------------------------------------------------------------
def _stats_kernel(halo_ref, x_ref, w_ref, stats_ref, *, K, D, mm_dtype):
    pad = (K - 1) * D
    B, _, T = x_ref.shape
    C_out = w_ref.shape[0]

    x = x_ref[...]
    if pad > 0:
        xw = jnp.concatenate([halo_ref[0], x], axis=-1)      # (B, C_in, pad+T)
    else:
        xw = x
    xw = xw.astype(mm_dtype)                                 # cast once, then slice
    w = w_ref[...].astype(mm_dtype)

    s = jnp.zeros((C_out, 1), jnp.float32)
    ss = jnp.zeros((C_out, 1), jnp.float32)
    for b in range(B):                                       # B is small & static
        acc = _conv_rows(xw[b], w, K=K, D=D, T=T)            # (C_out, T) f32
        s = s + jnp.sum(acc, axis=1, keepdims=True)
        ss = ss + jnp.sum(acc * acc, axis=1, keepdims=True)
    stats_ref[0] = jnp.concatenate([s, ss], axis=1)          # (C_out, 2)


# ---------------------------------------------------------------------------
# Pass 2: fused conv recompute + BatchNorm affine + ReLU (no intermediate).
# ---------------------------------------------------------------------------
def _conv_bn_relu_kernel(halo_ref, x_ref, w_ref, scale_ref, shift_ref, o_ref, *,
                         K, D, mm_dtype):
    pad = (K - 1) * D
    B, _, T = x_ref.shape

    x = x_ref[...]
    if pad > 0:
        xw = jnp.concatenate([halo_ref[0], x], axis=-1)
    else:
        xw = x
    xw = xw.astype(mm_dtype)
    w = w_ref[...].astype(mm_dtype)
    scale = scale_ref[...]                                   # (C_out, 1) f32
    shift = shift_ref[...]

    for b in range(B):
        acc = _conv_rows(xw[b], w, K=K, D=D, T=T)            # (C_out, T) f32
        y = acc * scale + shift
        o_ref[b] = jnp.maximum(y, 0.0).astype(o_ref.dtype)   # direct per-b store


# ---------------------------------------------------------------------------
# Generation-aware tiling / VMEM helpers
# ---------------------------------------------------------------------------
def _vmem_capacity_bytes():
    try:
        return int(pltpu.get_tpu_info().vmem_capacity_bytes)
    except Exception:                     # conservative fallback (v7x: 64 MiB/TC)
        return 64 * 1024 * 1024


def _choose_tile_l(L, B, c_in, c_out, K, D, budget):
    """Largest lane tile (multiple of 128 dividing L) whose per-pass working set
    (double-buffered tiles + in-kernel haloed/im2col temporaries) fits budget."""
    if L % 128 != 0:
        return L            # short / unaligned lengths -> one full-length block
    pad = (K - 1) * D
    per_col = 4 * (2 * B * c_in          # x tile, double buffered
                   + 2 * B * c_out       # output tile, double buffered
                   + B * c_in            # haloed window temporary
                   + K * c_in            # im2col temporary
                   + 2 * c_out)          # f32 accumulator / post-affine temp
    fixed = 4 * (3 * B * c_in * max(pad, 1) + c_out * K * c_in + 4 * c_out)
    cap = max(128, (budget - fixed) // max(per_col, 1))
    for cand in (2048, 1024, 512, 256, 128):
        if cand <= cap and L % cand == 0:
            return cand
    return 128


def _pass_vmem_bytes(B, c_in, c_out, K, D, T, out_block_elems):
    pad = (K - 1) * D
    return 4 * (2 * (B * c_in * T + B * c_in * max(pad, 1))      # dbl-buffered ins
                + c_out * K * c_in + 4 * c_out                   # weights + affine
                + 2 * out_block_elems                            # dbl-buffered out
                + B * c_in * (pad + T) + K * c_in * T + 2 * c_out * T)   # temps


def _vmem_limit(nbytes, cap):
    return int(min(max(2 * nbytes, 32 * 1024 * 1024), int(cap * 0.9)))


# ---------------------------------------------------------------------------
# Public wrapper
# ---------------------------------------------------------------------------
def tcn_block(x, weight, bias, gamma, beta, *, kernel_size, dilation,
              eps=1e-5, tile_l=None, matmul_dtype=jnp.float32):
    """ReLU(BatchNorm1d(causal dilated Conv1d(x))) with training-mode batch stats.

    x: (B, C_in, L) f32; weight: (C_out, C_in, K); bias/gamma/beta: (C_out,).
    Returns (B, C_out, L) f32.
    """
    B, C_in, L = x.shape
    C_out = weight.shape[0]
    K, D = kernel_size, dilation
    pad = (K - 1) * D
    pad_w = max(pad, 1)

    cap = _vmem_capacity_bytes()
    if tile_l is None:
        tile_l = _choose_tile_l(L, B, C_in, C_out, K, D, budget=(cap * 3) // 8)
    assert tile_l == L or tile_l % 128 == 0, "tile_l must be a multiple of 128 or == L"
    assert L % tile_l == 0, "tile_l must evenly divide L"
    num_tiles = L // tile_l

    # (C_out, C_in, K) -> (C_out, K*C_in), tap-major: column index = t*C_in + c.
    w2 = jnp.transpose(weight, (0, 2, 1)).reshape(C_out, K * C_in)

    # Tiny per-tile causal halo array: halos[i] = x[:, :, i*T - pad : i*T]
    # (zeros where the window reaches left of t=0). Keeps both grids fully
    # "parallel" with no carried scratch and no full-length padding of x.
    if pad > 0:
        col = jnp.arange(num_tiles)[:, None] * tile_l - pad + jnp.arange(pad)[None, :]
        valid = col >= 0
        halos = jnp.take(x, jnp.clip(col, 0, L - 1).reshape(-1), axis=2)
        halos = halos.reshape(B, C_in, num_tiles, pad)
        halos = jnp.where(valid[None, None], halos, jnp.zeros((), x.dtype))
        halos = jnp.transpose(halos, (2, 0, 1, 3))       # (num_tiles, B, C_in, pad)
    else:
        halos = jnp.zeros((num_tiles, B, C_in, 1), x.dtype)

    halo_spec = pl.BlockSpec((1, B, C_in, pad_w), lambda i: (i, 0, 0, 0))
    x_spec = pl.BlockSpec((B, C_in, tile_l), lambda i: (0, 0, i))
    w_spec = pl.BlockSpec((C_out, K * C_in), lambda i: (0, 0))

    # ---- Pass 1: per-tile conv statistics (stats-only, no conv writeback) ----
    stats = pl.pallas_call(
        functools.partial(_stats_kernel, K=K, D=D, mm_dtype=matmul_dtype),
        grid=(num_tiles,),
        in_specs=[halo_spec, x_spec, w_spec],
        out_specs=pl.BlockSpec((1, C_out, 2), lambda i: (i, 0, 0)),
        out_shape=jax.ShapeDtypeStruct((num_tiles, C_out, 2), jnp.float32),
        compiler_params=pltpu.CompilerParams(
            dimension_semantics=("parallel",),
            vmem_limit_bytes=_vmem_limit(
                _pass_vmem_bytes(B, C_in, C_out, K, D, tile_l, C_out * 2), cap)),
    )(halos, x, w2)

    # ---- Tiny per-channel BN math between the passes (plain JAX) ----
    n = float(B * L)
    mean = jnp.sum(stats[:, :, 0], axis=0) / n               # biased batch mean
    # E[y^2] - E[y]^2 in f32: adequate at these scales (shifted/Welford combine
    # would be needed only for extreme |mean|/std or very large B*L).
    var = jnp.maximum(jnp.sum(stats[:, :, 1], axis=0) / n - mean * mean, 0.0)
    scale = gamma * jax.lax.rsqrt(var + eps)
    # Batch-statistics BatchNorm removes any per-channel constant, so the Conv1d
    # bias cancels exactly: BN(conv + bias) == BN(conv). It is folded away here
    # (kept in the signature for nn.Conv1d API parity; would only matter for
    # eval-mode running statistics).
    shift = beta - mean * scale
    scale2 = scale.reshape(C_out, 1).astype(jnp.float32)
    shift2 = shift.reshape(C_out, 1).astype(jnp.float32)

    # ---- Pass 2: fused conv recompute + BN affine + ReLU ----
    out = pl.pallas_call(
        functools.partial(_conv_bn_relu_kernel, K=K, D=D, mm_dtype=matmul_dtype),
        grid=(num_tiles,),
        in_specs=[halo_spec, x_spec, w_spec,
                  pl.BlockSpec((C_out, 1), lambda i: (0, 0)),
                  pl.BlockSpec((C_out, 1), lambda i: (0, 0))],
        out_specs=pl.BlockSpec((B, C_out, tile_l), lambda i: (0, 0, i)),
        out_shape=jax.ShapeDtypeStruct((B, C_out, L), jnp.float32),
        compiler_params=pltpu.CompilerParams(
            dimension_semantics=("parallel",),
            vmem_limit_bytes=_vmem_limit(
                _pass_vmem_bytes(B, C_in, C_out, K, D, tile_l, B * C_out * tile_l),
                cap)),
    )(halos, x, w2, scale2, shift2)
    return out


# ---------------------------------------------------------------------------
# Plain-JAX reference of the PyTorch forward (for verification)
# ---------------------------------------------------------------------------
def _reference(x, weight, bias, gamma, beta, *, kernel_size, dilation, eps=1e-5):
    B, C_in, L = x.shape
    C_out = weight.shape[0]
    pad = (kernel_size - 1) * dilation
    xpad = jnp.pad(x, ((0, 0), (0, 0), (pad, 0)))
    y = jnp.zeros((B, C_out, L), jnp.float32)
    for t in range(kernel_size):
        y = y + jnp.einsum("oi,bil->bol", weight[:, :, t],
                           xpad[:, :, t * dilation: t * dilation + L])
    y = y + bias[None, :, None]
    mean = jnp.mean(y, axis=(0, 2), keepdims=True)
    var = jnp.mean((y - mean) ** 2, axis=(0, 2), keepdims=True)
    y = (y - mean) * jax.lax.rsqrt(var + eps)
    y = y * gamma[None, :, None] + beta[None, :, None]
    return jnp.maximum(y, 0.0)


if __name__ == "__main__":
    key = jax.random.PRNGKey(0)
    kx, kw, kb, kx2 = jax.random.split(key, 4)

    B, C_IN, C_OUT, KSZ, DIL = 2, 4, 8, 3, 2
    fan_in = C_IN * KSZ
    bound = 1.0 / (fan_in ** 0.5)
    weight = jax.random.uniform(kw, (C_OUT, C_IN, KSZ),
                                minval=-bound, maxval=bound, dtype=jnp.float32)
    bias = jax.random.uniform(kb, (C_OUT,), minval=-bound, maxval=bound,
                              dtype=jnp.float32)
    gamma = jnp.ones((C_OUT,), jnp.float32)   # BatchNorm1d weight init
    beta = jnp.zeros((C_OUT,), jnp.float32)   # BatchNorm1d bias init

    # Case 1: module-sized small shapes (single full-length L block).
    L = 16
    x = jax.random.normal(kx, (B, C_IN, L), dtype=jnp.float32)
    fn = jax.jit(functools.partial(tcn_block, kernel_size=KSZ, dilation=DIL))
    out = jax.block_until_ready(fn(x, weight, bias, gamma, beta))
    ref = _reference(x, weight, bias, gamma, beta, kernel_size=KSZ, dilation=DIL)
    assert out.shape == (B, C_OUT, L)
    assert jnp.allclose(out, ref, atol=1e-4, rtol=1e-4), \
        float(jnp.max(jnp.abs(out - ref)))

    # Case 2: exercises the multi-tile parallel grid + halo gather (L=256).
    L2 = 256
    x2 = jax.random.normal(kx2, (B, C_IN, L2), dtype=jnp.float32)
    fn2 = jax.jit(functools.partial(tcn_block, kernel_size=KSZ, dilation=DIL,
                                    tile_l=128))
    out2 = jax.block_until_ready(fn2(x2, weight, bias, gamma, beta))
    ref2 = _reference(x2, weight, bias, gamma, beta, kernel_size=KSZ, dilation=DIL)
    assert out2.shape == (B, C_OUT, L2)
    assert jnp.allclose(out2, ref2, atol=1e-4, rtol=1e-4), \
        float(jnp.max(jnp.abs(out2 - ref2)))

    # Case 3: bf16 MXU inputs (f32 accumulation) — loose tolerance sanity check.
    fn3 = jax.jit(functools.partial(tcn_block, kernel_size=KSZ, dilation=DIL,
                                    tile_l=128, matmul_dtype=jnp.bfloat16))
    out3 = jax.block_until_ready(fn3(x2, weight, bias, gamma, beta))
    assert jnp.allclose(out3, ref2, atol=5e-2, rtol=5e-2), \
        float(jnp.max(jnp.abs(out3 - ref2)))

    print("KERNEL_OK")
</pallas_src>

<mosaic_0001>
module attributes {stable_mosaic.version = 11 : i64} {
  func.func @_stats_kernel(%arg0: i32, %arg1: memref<1x2x4x4xf32, #tpu.memory_space<vmem>>, %arg2: memref<2x4x16xf32, #tpu.memory_space<vmem>>, %arg3: memref<8x12xf32, #tpu.memory_space<vmem>>, %arg4: memref<1x8x2xf32, #tpu.memory_space<vmem>>) attributes {dimension_semantics = [#tpu.dimension_semantics<parallel>], iteration_bounds = array<i64: 1>, scalar_prefetch = 0 : i64, scratch_operands = 0 : i64, tpu.core_type = #tpu.core_type<tc>, window_params = [{transform_indices = @transform_0, window_bounds = array<i64: 1, 2, 4, 4>}, {transform_indices = @transform_1, window_bounds = array<i64: 2, 4, 16>}, {pipeline_mode = #tpu.pipeline_mode<synchronous>, transform_indices = @transform_2, window_bounds = array<i64: 8, 12>}, {transform_indices = @transform_3, window_bounds = array<i64: 1, 8, 2>}]} {
    %c0 = arith.constant 0 : index
    %c0_0 = arith.constant 0 : index
    %c0_1 = arith.constant 0 : index
    %0 = vector.load %arg2[%c0, %c0_0, %c0_1] : memref<2x4x16xf32, #tpu.memory_space<vmem>>, vector<2x4x16xf32>
    %c0_2 = arith.constant 0 : index
    %c0_3 = arith.constant 0 : index
    %c0_4 = arith.constant 0 : index
    %c0_5 = arith.constant 0 : index
    %1 = vector.load %arg1[%c0_2, %c0_3, %c0_4, %c0_5] : memref<1x2x4x4xf32, #tpu.memory_space<vmem>>, vector<1x2x4x4xf32>
    %2 = vector.shape_cast %1 : vector<1x2x4x4xf32> to vector<2x4x4xf32>
    %3 = tpu.concatenate %2, %0 in 2 : vector<2x4x4xf32>, vector<2x4x16xf32> -> vector<2x4x20xf32>
    %c0_6 = arith.constant 0 : index
    %c0_7 = arith.constant 0 : index
    %4 = vector.load %arg3[%c0_6, %c0_7] : memref<8x12xf32, #tpu.memory_space<vmem>>, vector<8x12xf32>
    %cst = arith.constant 0.000000e+00 : f32
    %5 = vector.broadcast %cst : f32 to vector<8x1xf32>
    %cst_8 = arith.constant 0.000000e+00 : f32
    %6 = vector.broadcast %cst_8 : f32 to vector<8x1xf32>
    %7 = vector.extract_strided_slice %3 {offsets = [0, 0, 0], sizes = [1, 4, 20], strides = [1, 1, 1]} : vector<2x4x20xf32> to vector<1x4x20xf32>
    %8 = vector.shape_cast %7 : vector<1x4x20xf32> to vector<4x20xf32>
    %9 = vector.extract_strided_slice %8 {offsets = [0, 0], sizes = [4, 16], strides = [1, 1]} : vector<4x20xf32> to vector<4x16xf32>
    %10 = vector.extract_strided_slice %8 {offsets = [0, 2], sizes = [4, 16], strides = [1, 1]} : vector<4x20xf32> to vector<4x16xf32>
    %11 = vector.extract_strided_slice %8 {offsets = [0, 4], sizes = [4, 16], strides = [1, 1]} : vector<4x20xf32> to vector<4x16xf32>
    %12 = tpu.concatenate %9, %10, %11 in 0 : vector<4x16xf32>, vector<4x16xf32>, vector<4x16xf32> -> vector<12x16xf32>
    %cst_9 = arith.constant dense<0.000000e+00> : vector<8x16xf32>
    %13 = tpu.matmul %4, %12, %cst_9 {dimension_numbers = #tpu.dot_dimension_numbers<[1], [0], [0], [1], [0, 0, 1, 1], [], []>} : vector<8x12xf32>, vector<12x16xf32>, vector<8x16xf32> -> vector<8x16xf32>
    %cst_10 = arith.constant dense<0.000000e+00> : vector<8xf32>
    %14 = vector.multi_reduction <add>, %13, %cst_10 [1] : vector<8x16xf32> to vector<8xf32>
    %15 = vector.shape_cast %14 : vector<8xf32> to vector<8x1xf32>
    %16 = arith.addf %5, %15 : vector<8x1xf32>
    %17 = arith.mulf %13, %13 : vector<8x16xf32>
    %cst_11 = arith.constant dense<0.000000e+00> : vector<8xf32>
    %18 = vector.multi_reduction <add>, %17, %cst_11 [1] : vector<8x16xf32> to vector<8xf32>
    %19 = vector.shape_cast %18 : vector<8xf32> to vector<8x1xf32>
    %20 = arith.addf %6, %19 : vector<8x1xf32>
    %21 = vector.extract_strided_slice %3 {offsets = [1, 0, 0], sizes = [1, 4, 20], strides = [1, 1, 1]} : vector<2x4x20xf32> to vector<1x4x20xf32>
    %22 = vector.shape_cast %21 : vector<1x4x20xf32> to vector<4x20xf32>
    %23 = vector.extract_strided_slice %22 {offsets = [0, 0], sizes = [4, 16], strides = [1, 1]} : vector<4x20xf32> to vector<4x16xf32>
    %24 = vector.extract_strided_slice %22 {offsets = [0, 2], sizes = [4, 16], strides = [1, 1]} : vector<4x20xf32> to vector<4x16xf32>
    %25 = vector.extract_strided_slice %22 {offsets = [0, 4], sizes = [4, 16], strides = [1, 1]} : vector<4x20xf32> to vector<4x16xf32>
    %26 = tpu.concatenate %23, %24, %25 in 0 : vector<4x16xf32>, vector<4x16xf32>, vector<4x16xf32> -> vector<12x16xf32>
    %cst_12 = arith.constant dense<0.000000e+00> : vector<8x16xf32>
    %27 = tpu.matmul %4, %26, %cst_12 {dimension_numbers = #tpu.dot_dimension_numbers<[1], [0], [0], [1], [0, 0, 1, 1], [], []>} : vector<8x12xf32>, vector<12x16xf32>, vector<8x16xf32> -> vector<8x16xf32>
    %cst_13 = arith.constant dense<0.000000e+00> : vector<8xf32>
    %28 = vector.multi_reduction <add>, %27, %cst_13 [1] : vector<8x16xf32> to vector<8xf32>
    %29 = vector.shape_cast %28 : vector<8xf32> to vector<8x1xf32>
    %30 = arith.addf %16, %29 : vector<8x1xf32>
    %31 = arith.mulf %27, %27 : vector<8x16xf32>
    %cst_14 = arith.constant dense<0.000000e+00> : vector<8xf32>
    %32 = vector.multi_reduction <add>, %31, %cst_14 [1] : vector<8x16xf32> to vector<8xf32>
    %33 = vector.shape_cast %32 : vector<8xf32> to vector<8x1xf32>
    %34 = arith.addf %20, %33 : vector<8x1xf32>
    %35 = tpu.concatenate %30, %34 in 1 : vector<8x1xf32>, vector<8x1xf32> -> vector<8x2xf32>
    %c0_15 = arith.constant 0 : index
    %c0_16 = arith.constant 0 : index
    %c0_17 = arith.constant 0 : index
    %36 = vector.load %arg4[%c0_15, %c0_16, %c0_17] : memref<1x8x2xf32, #tpu.memory_space<vmem>>, vector<1x8x2xf32>
    %37 = vector.shape_cast %36 : vector<1x8x2xf32> to vector<8x2xf32>
    %38 = vector.shape_cast %35 : vector<8x2xf32> to vector<1x8x2xf32>
    tpu.vector_store %arg4[%c0_15, %c0_16, %c0_17], %38 {strides = array<i32>} : memref<1x8x2xf32, #tpu.memory_space<vmem>>, vector<1x8x2xf32>,
    return
  }
  func.func @transform_0(%arg0: i32) -> (i32, i32, i32, i32) {
    %c0_i32 = arith.constant 0 : i32
    %c0_i32_0 = arith.constant 0 : i32
    %c0_i32_1 = arith.constant 0 : i32
    %c0_i32_2 = arith.constant 0 : i32
    return %arg0, %c0_i32, %c0_i32_0, %c0_i32_1 : i32, i32, i32, i32
  }
  func.func @transform_1(%arg0: i32) -> (i32, i32, i32) {
    %c0_i32 = arith.constant 0 : i32
    %c0_i32_0 = arith.constant 0 : i32
    %c0_i32_1 = arith.constant 0 : i32
    return %c0_i32, %c0_i32_0, %arg0 : i32, i32, i32
  }
  func.func @transform_2(%arg0: i32) -> (i32, i32) {
    %c0_i32 = arith.constant 0 : i32
    %c0_i32_0 = arith.constant 0 : i32
    %c0_i32_1 = arith.constant 0 : i32
    return %c0_i32, %c0_i32_0 : i32, i32
  }
  func.func @transform_3(%arg0: i32) -> (i32, i32, i32) {
    %c0_i32 = arith.constant 0 : i32
    %c0_i32_0 = arith.constant 0 : i32
    %c0_i32_1 = arith.constant 0 : i32
    return %arg0, %c0_i32, %c0_i32_0 : i32, i32, i32
  }
}

module attributes {stable_mosaic.version = 11 : i64} {
  func.func @_conv_bn_relu_kernel(%arg0: i32, %arg1: memref<1x2x4x4xf32, #tpu.memory_space<vmem>>, %arg2: memref<2x4x16xf32, #tpu.memory_space<vmem>>, %arg3: memref<8x12xf32, #tpu.memory_space<vmem>>, %arg4: memref<8x1xf32, #tpu.memory_space<vmem>>, %arg5: memref<8x1xf32, #tpu.memory_space<vmem>>, %arg6: memref<2x8x16xf32, #tpu.memory_space<vmem>>) attributes {dimension_semantics = [#tpu.dimension_semantics<parallel>], iteration_bounds = array<i64: 1>, scalar_prefetch = 0 : i64, scratch_operands = 0 : i64, tpu.core_type = #tpu.core_type<tc>, window_params = [{transform_indices = @transform_0, window_bounds = array<i64: 1, 2, 4, 4>}, {transform_indices = @transform_1, window_bounds = array<i64: 2, 4, 16>}, {pipeline_mode = #tpu.pipeline_mode<synchronous>, transform_indices = @transform_2, window_bounds = array<i64: 8, 12>}, {pipeline_mode = #tpu.pipeline_mode<synchronous>, transform_indices = @transform_3, window_bounds = array<i64: 8, 1>}, {pipeline_mode = #tpu.pipeline_mode<synchronous>, transform_indices = @transform_4, window_bounds = array<i64: 8, 1>}, {transform_indices = @transform_5, window_bounds = array<i64: 2, 8, 16>}]} {
    %c0 = arith.constant 0 : index
    %c0_0 = arith.constant 0 : index
    %c0_1 = arith.constant 0 : index
    %0 = vector.load %arg2[%c0, %c0_0, %c0_1] : memref<2x4x16xf32, #tpu.memory_space<vmem>>, vector<2x4x16xf32>
    %c0_2 = arith.constant 0 : index
    %c0_3 = arith.constant 0 : index
    %c0_4 = arith.constant 0 : index
    %c0_5 = arith.constant 0 : index
    %1 = vector.load %arg1[%c0_2, %c0_3, %c0_4, %c0_5] : memref<1x2x4x4xf32, #tpu.memory_space<vmem>>, vector<1x2x4x4xf32>
    %2 = vector.shape_cast %1 : vector<1x2x4x4xf32> to vector<2x4x4xf32>
    %3 = tpu.concatenate %2, %0 in 2 : vector<2x4x4xf32>, vector<2x4x16xf32> -> vector<2x4x20xf32>
    %c0_6 = arith.constant 0 : index
    %c0_7 = arith.constant 0 : index
    %4 = vector.load %arg3[%c0_6, %c0_7] : memref<8x12xf32, #tpu.memory_space<vmem>>, vector<8x12xf32>
    %c0_8 = arith.constant 0 : index
    %c0_9 = arith.constant 0 : index
    %5 = vector.load %arg4[%c0_8, %c0_9] : memref<8x1xf32, #tpu.memory_space<vmem>>, vector<8x1xf32>
    %c0_10 = arith.constant 0 : index
    %c0_11 = arith.constant 0 : index
    %6 = vector.load %arg5[%c0_10, %c0_11] : memref<8x1xf32, #tpu.memory_space<vmem>>, vector<8x1xf32>
    %7 = vector.extract_strided_slice %3 {offsets = [0, 0, 0], sizes = [1, 4, 20], strides = [1, 1, 1]} : vector<2x4x20xf32> to vector<1x4x20xf32>
    %8 = vector.shape_cast %7 : vector<1x4x20xf32> to vector<4x20xf32>
    %9 = vector.extract_strided_slice %8 {offsets = [0, 0], sizes = [4, 16], strides = [1, 1]} : vector<4x20xf32> to vector<4x16xf32>
    %10 = vector.extract_strided_slice %8 {offsets = [0, 2], sizes = [4, 16], strides = [1, 1]} : vector<4x20xf32> to vector<4x16xf32>
    %11 = vector.extract_strided_slice %8 {offsets = [0, 4], sizes = [4, 16], strides = [1, 1]} : vector<4x20xf32> to vector<4x16xf32>
    %12 = tpu.concatenate %9, %10, %11 in 0 : vector<4x16xf32>, vector<4x16xf32>, vector<4x16xf32> -> vector<12x16xf32>
    %cst = arith.constant dense<0.000000e+00> : vector<8x16xf32>
    %13 = tpu.matmul %4, %12, %cst {dimension_numbers = #tpu.dot_dimension_numbers<[1], [0], [0], [1], [0, 0, 1, 1], [], []>} : vector<8x12xf32>, vector<12x16xf32>, vector<8x16xf32> -> vector<8x16xf32>
    %14 = vector.broadcast %5 : vector<8x1xf32> to vector<8x16xf32>
    %15 = arith.mulf %13, %14 : vector<8x16xf32>
    %16 = vector.broadcast %6 : vector<8x1xf32> to vector<8x16xf32>
    %17 = arith.addf %15, %16 : vector<8x16xf32>
    %cst_12 = arith.constant 0.000000e+00 : f32
    %18 = vector.broadcast %cst_12 : f32 to vector<8x16xf32>
    %19 = arith.maximumf %17, %18 : vector<8x16xf32>
    %c0_13 = arith.constant 0 : index
    %c0_14 = arith.constant 0 : index
    %c0_15 = arith.constant 0 : index
    %20 = vector.load %arg6[%c0_13, %c0_14, %c0_15] : memref<2x8x16xf32, #tpu.memory_space<vmem>>, vector<1x8x16xf32>
    %21 = vector.shape_cast %20 : vector<1x8x16xf32> to vector<8x16xf32>
    %22 = vector.shape_cast %19 : vector<8x16xf32> to vector<1x8x16xf32>
    tpu.vector_store %arg6[%c0_13, %c0_14, %c0_15], %22 {strides = array<i32>} : memref<2x8x16xf32, #tpu.memory_space<vmem>>, vector<1x8x16xf32>,
    %23 = vector.extract_strided_slice %3 {offsets = [1, 0, 0], sizes = [1, 4, 20], strides = [1, 1, 1]} : vector<2x4x20xf32> to vector<1x4x20xf32>
    %24 = vector.shape_cast %23 : vector<1x4x20xf32> to vector<4x20xf32>
    %25 = vector.extract_strided_slice %24 {offsets = [0, 0], sizes = [4, 16], strides = [1, 1]} : vector<4x20xf32> to vector<4x16xf32>
    %26 = vector.extract_strided_slice %24 {offsets = [0, 2], sizes = [4, 16], strides = [1, 1]} : vector<4x20xf32> to vector<4x16xf32>
    %27 = vector.extract_strided_slice %24 {offsets = [0, 4], sizes = [4, 16], strides = [1, 1]} : vector<4x20xf32> to vector<4x16xf32>
    %28 = tpu.concatenate %25, %26, %27 in 0 : vector<4x16xf32>, vector<4x16xf32>, vector<4x16xf32> -> vector<12x16xf32>
    %cst_16 = arith.constant dense<0.000000e+00> : vector<8x16xf32>
    %29 = tpu.matmul %4, %28, %cst_16 {dimension_numbers = #tpu.dot_dimension_numbers<[1], [0], [0], [1], [0, 0, 1, 1], [], []>} : vector<8x12xf32>, vector<12x16xf32>, vector<8x16xf32> -> vector<8x16xf32>
    %30 = vector.broadcast %5 : vector<8x1xf32> to vector<8x16xf32>
    %31 = arith.mulf %29, %30 : vector<8x16xf32>
    %32 = vector.broadcast %6 : vector<8x1xf32> to vector<8x16xf32>
    %33 = arith.addf %31, %32 : vector<8x16xf32>
    %cst_17 = arith.constant 0.000000e+00 : f32
    %34 = vector.broadcast %cst_17 : f32 to vector<8x16xf32>
    %35 = arith.maximumf %33, %34 : vector<8x16xf32>
    %c1 = arith.constant 1 : index
    %c0_18 = arith.constant 0 : index
    %c0_19 = arith.constant 0 : index
    %36 = vector.load %arg6[%c1, %c0_18, %c0_19] : memref<2x8x16xf32, #tpu.memory_space<vmem>>, vector<1x8x16xf32>
    %37 = vector.shape_cast %36 : vector<1x8x16xf32> to vector<8x16xf32>
    %38 = vector.shape_cast %35 : vector<8x16xf32> to vector<1x8x16xf32>
    tpu.vector_store %arg6[%c1, %c0_18, %c0_19], %38 {strides = array<i32>} : memref<2x8x16xf32, #tpu.memory_space<vmem>>, vector<1x8x16xf32>,
    return
  }
  func.func @transform_0(%arg0: i32) -> (i32, i32, i32, i32) {
    %c0_i32 = arith.constant 0 : i32
    %c0_i32_0 = arith.constant 0 : i32
    %c0_i32_1 = arith.constant 0 : i32
    %c0_i32_2 = arith.constant 0 : i32
    return %arg0, %c0_i32, %c0_i32_0, %c0_i32_1 : i32, i32, i32, i32
  }
  func.func @transform_1(%arg0: i32) -> (i32, i32, i32) {
    %c0_i32 = arith.constant 0 : i32
    %c0_i32_0 = arith.constant 0 : i32
    %c0_i32_1 = arith.constant 0 : i32
    return %c0_i32, %c0_i32_0, %arg0 : i32, i32, i32
  }
  func.func @transform_2(%arg0: i32) -> (i32, i32) {
    %c0_i32 = arith.constant 0 : i32
    %c0_i32_0 = arith.constant 0 : i32
    %c0_i32_1 = arith.constant 0 : i32
    return %c0_i32, %c0_i32_0 : i32, i32
  }
  func.func @transform_3(%arg0: i32) -> (i32, i32) {
    %c0_i32 = arith.constant 0 : i32
    %c0_i32_0 = arith.constant 0 : i32
    %c0_i32_1 = arith.constant 0 : i32
    return %c0_i32, %c0_i32_0 : i32, i32
  }
  func.func @transform_4(%arg0: i32) -> (i32, i32) {
    %c0_i32 = arith.constant 0 : i32
    %c0_i32_0 = arith.constant 0 : i32
    %c0_i32_1 = arith.constant 0 : i32
    return %c0_i32, %c0_i32_0 : i32, i32
  }
  func.func @transform_5(%arg0: i32) -> (i32, i32, i32) {
    %c0_i32 = arith.constant 0 : i32
    %c0_i32_0 = arith.constant 0 : i32
    %c0_i32_1 = arith.constant 0 : i32
    return %c0_i32, %c0_i32_0, %arg0 : i32, i32, i32
  }
}

</mosaic_0001>

<llo_original>
// kernel: tcn_block.2
$region0: #{tcn_block.2}
  #allocation0 [shape = 'u32[]', space=smem, size = 0x4, offset = 0x4, fixed_abs, tag = 'smem constant byte address 0x4 - core index']
  #allocation1 [shape = 'u32[72,128]{1,0:T(1,128)}', space=vmem, size = 0x9000, scoped, tag = 'internal scratch']
  %s0 = inlined_call_operand.vmem [shape: f32[1,2,4,4], index: 0, kind: input, shape index: {}]
  %s1 = inlined_call_operand.vmem [shape: f32[2,4,16], index: 1, kind: input, shape index: {}]
  %s2 = inlined_call_operand.vmem [shape: f32[8,12], index: 2, kind: input, shape index: {}]
  %s3 = inlined_call_operand.vmem [shape: f32[1,8,2], index: 3, kind: output, shape index: {}]
  %s4 = sld [smem:[#allocation0]]
  $region22: #{tcn_block.2} parent=0
    _
  %s6 = ssub.s32 1, %s4
  %s7 = scalar_select 0, %s6, %s4
  // Predicated region
  $region2: #{tcn_block.2} parent=0 // pred_check
    _
  $region3: #{tcn_block.2} parent=0 // pred_check_branch
    %9 = sbr.rel (0) target = $region5
  $region4: #{tcn_block.2} parent=0 // pred_region
    _
  $region5: #{tcn_block.2} parent=0 // pred_fallthru
    _
  // Predicated region
  $region6: #{tcn_block.2} parent=0 // pred_check
    _
  $region7: #{tcn_block.2} parent=0 // pred_check_branch
    %11 = sbr.rel (0) target = $region9
  $region8: #{tcn_block.2} parent=0 // pred_region
    _
  $region9: #{tcn_block.2} parent=0 // pred_fallthru
    _
  // Predicated region
  $region10: #{tcn_block.2} parent=0 // pred_check
    _
  $region11: #{tcn_block.2} parent=0 // pred_check_branch
    %13 = sbr.rel (0) target = $region13
  $region12: #{tcn_block.2} parent=0 // pred_region
    _
  $region13: #{tcn_block.2} parent=0 // pred_fallthru
    _
  %v14 = vld [vmem:[%s1] sm:$0xf]
  %v15 = vld [vmem:[%s1 + $0x4] sm:$0xf]
  %v16 = vld [vmem:[%s0] sm:$0xf]
  %v17 = vld [vmem:[%s0 + $0x4] sm:$0xf]
  %20 = vrot.lane.b32.xlu0 %v14, 4
  %v21 = vpop.permute.xlu0 %20
  %22 = vrot.lane.b32.xlu0 %v15, 4
  %v23 = vpop.permute.xlu0 %22
  %vm26 = vcmask 31744
  %v27 = vsel %vm26, %v16, %v21
  %v28 = vsel %vm26, %v17, %v23
  %v29 = vld [vmem:[%s2] sm:$0xff]
  %v31 = vrot.slane %v27, 4
  %32 = vrot.lane.b32.xlu0 %v31, 126
  %v33 = vpop.permute.xlu0 %32
  %35 = vrot.lane.b32.xlu0 %v27, 124
  %v36 = vpop.permute.xlu0 %35
  %vm37 = vcmask 1043456
  %v38 = vsel %vm37, %v27, %v33
  %vm39 = vcmask 97280
  %v41 = vsel %vm39, %v29, 0
  %v43 = vsel %vm37, %v36, 0
  %45 = vmatpush.msra.mxu0 0.0
  %46 = vmatpush.msra.mxu0 0.0
  %47 = vmatpush.msra.mxu0 0.0
  %48 = vmatpush.msra.mxu0 0.0
  %49 = vmatpush.msra.mxu0 0.0
  %50 = vmatpush.msra.mxu0 0.0
  %51 = vmatpush.msra.mxu0 0.0
  %52 = vmatpush.msra.mxu0 0.0
  %53 = vmatpush.msra.mxu0 0.0
  %54 = vmatpush.msra.mxu0 0.0
  %55 = vmatpush.msra.mxu0 0.0
  %56 = vmatpush.msra.mxu0 0.0
  %57 = vmatpush.msra.mxu0 0.0
  %58 = vmatpush.msra.mxu0 0.0
  %59 = vmatpush.msra.mxu0 %v43
  %60 = vmatpush.msra.mxu0 %v38
  %61 = vmatmul.f32.gmra.mxu0 %v41
  %v62 = vpop.f32.mrf.mxu0
  %v63 = vadd.f32 0.0, %v62
  %64 = vdwg.mxu0
  %vm65 = vcmask 130048
  %v66 = vsel %vm65, %v63, 0.0
  %67 = vadd.xlane.f32.xlu0 %v66
  %v68 = vpop.xlane.xlu0 %67
  %v69 = vadd.f32 %v68, 0.0
  %v70 = vmul.f32 %v63, %v63
  %v71 = vsel %vm65, %v70, 0.0
  %72 = vadd.xlane.f32.xlu0 %v71
  %v73 = vpop.xlane.xlu0 %72
  %v74 = vadd.f32 %v73, 0.0
  %v76 = vrot.slane %v28, 4
  %77 = vrot.lane.b32.xlu0 %v76, 126
  %v78 = vpop.permute.xlu0 %77
  %80 = vrot.lane.b32.xlu0 %v28, 124
  %v81 = vpop.permute.xlu0 %80
  %v82 = vsel %vm37, %v28, %v78
  %v83 = vsel %vm37, %v81, 0
  %85 = vmatpush.msra.mxu0 0.0
  %86 = vmatpush.msra.mxu0 0.0
  %87 = vmatpush.msra.mxu0 0.0
  %88 = vmatpush.msra.mxu0 0.0
  %89 = vmatpush.msra.mxu0 0.0
  %90 = vmatpush.msra.mxu0 0.0
  %91 = vmatpush.msra.mxu0 0.0
  %92 = vmatpush.msra.mxu0 0.0
  %93 = vmatpush.msra.mxu0 0.0
  %94 = vmatpush.msra.mxu0 0.0
  %95 = vmatpush.msra.mxu0 0.0
  %96 = vmatpush.msra.mxu0 0.0
  %97 = vmatpush.msra.mxu0 0.0
  %98 = vmatpush.msra.mxu0 0.0
  %99 = vmatpush.msra.mxu0 %v83
  %100 = vmatpush.msra.mxu0 %v82
  %101 = vmatmul.f32.gmra.mxu0 %v41
  %v102 = vpop.f32.mrf.mxu0
  %v103 = vadd.f32 0.0, %v102
  %104 = vdwg.mxu0
  %v105 = vsel %vm65, %v103, 0.0
  %106 = vadd.xlane.f32.xlu0 %v105
  %v107 = vpop.xlane.xlu0 %106
  %v108 = vadd.f32 %v69, %v107
  %v109 = vmul.f32 %v103, %v103
  %v110 = vsel %vm65, %v109, 0.0
  %111 = vadd.xlane.f32.xlu0 %v110
  %v112 = vpop.xlane.xlu0 %111
  %v113 = vadd.f32 %v74, %v112
  %vm114 = vcmask 7168
  %v115 = vsel %vm114, %v108, %v113
  %vm116 = vcmask 15360
  %117 = vst.msk [vmem:[%s3] sm:$0xff] %vm116, %v115
  // Predicated region
  $region14: #{tcn_block.2} parent=0 // pred_check
    _
  $region15: #{tcn_block.2} parent=0 // pred_check_branch
    %119 = sbr.rel (0) target = $region17
  $region16: #{tcn_block.2} parent=0 // pred_region
    _
  $region17: #{tcn_block.2} parent=0 // pred_fallthru
    _
  // Predicated region
  $region18: #{tcn_block.2} parent=0 // pred_check
    _
  $region19: #{tcn_block.2} parent=0 // pred_check_branch
    %121 = sbr.rel (0) target = $region21
  $region20: #{tcn_block.2} parent=0 // pred_region
    _
  $region21: #{tcn_block.2} parent=0 // pred_fallthru
    _

// kernel: tcn_block.3
$region0: #{tcn_block.3}
  #allocation0 [shape = 'u32[]', space=smem, size = 0x4, offset = 0x4, fixed_abs, tag = 'smem constant byte address 0x4 - core index']
  #allocation1 [shape = 'u32[72,128]{1,0:T(1,128)}', space=vmem, size = 0x9000, scoped, tag = 'internal scratch']
  %s0 = inlined_call_operand.vmem [shape: f32[1,2,4,4], index: 0, kind: input, shape index: {}]
  %s1 = inlined_call_operand.vmem [shape: f32[2,4,16], index: 1, kind: input, shape index: {}]
  %s2 = inlined_call_operand.vmem [shape: f32[8,12], index: 2, kind: input, shape index: {}]
  %s3 = inlined_call_operand.vmem [shape: f32[8,1], index: 3, kind: input, shape index: {}]
  %s4 = inlined_call_operand.vmem [shape: f32[8,1], index: 4, kind: input, shape index: {}]
  %s5 = inlined_call_operand.hbm [shape: f32[2,8,16], index: 5, kind: output, shape index: {}]
  %s6 = sld [smem:[#allocation0]]
  $region30: #{tcn_block.3} parent=0
    _
  %s8 = ssub.s32 1, %s6
  %s9 = scalar_select 0, %s8, %s6
  $region1: #{tcn_block.3} parent=0
    #allocation2 [shape = 'u8[8192]{0}', space=vmem, size = 0x2000, scoped, tag = 'output window, operand 0, single buffered']
    #allocation3 [shape = 's32[1]{0}', space=sflag, size = 0x4, scoped, tag = 'scoped memory for tcn_block.3']
    %10 = vsyncpa [#allocation3], 0
    // Predicated region
    $region2: #{tcn_block.3} parent=1 // pred_check
      _
    $region3: #{tcn_block.3} parent=1 // pred_check_branch
      %12 = sbr.rel (0) target = $region5
    $region4: #{tcn_block.3} parent=1 // pred_region
      _
    $region5: #{tcn_block.3} parent=1 // pred_fallthru
      _
    // Predicated region
    $region6: #{tcn_block.3} parent=1 // pred_check
      _
    $region7: #{tcn_block.3} parent=1 // pred_check_branch
      %14 = sbr.rel (0) target = $region9
    $region8: #{tcn_block.3} parent=1 // pred_region
      _
    $region9: #{tcn_block.3} parent=1 // pred_fallthru
      _
    // Predicated region
    $region10: #{tcn_block.3} parent=1 // pred_check
      _
    $region11: #{tcn_block.3} parent=1 // pred_check_branch
      %16 = sbr.rel (0) target = $region13
    $region12: #{tcn_block.3} parent=1 // pred_region
      _
    $region13: #{tcn_block.3} parent=1 // pred_fallthru
      _
    // Predicated region
    $region14: #{tcn_block.3} parent=1 // pred_check
      _
    $region15: #{tcn_block.3} parent=1 // pred_check_branch
      %18 = sbr.rel (0) target = $region17
    $region16: #{tcn_block.3} parent=1 // pred_region
      _
    $region17: #{tcn_block.3} parent=1 // pred_fallthru
      _
    // Predicated region
    $region18: #{tcn_block.3} parent=1 // pred_check
      _
    $region19: #{tcn_block.3} parent=1 // pred_check_branch
      %20 = sbr.rel (0) target = $region21
    $region20: #{tcn_block.3} parent=1 // pred_region
      _
    $region21: #{tcn_block.3} parent=1 // pred_fallthru
      _
    %v21 = vld [vmem:[%s1] sm:$0xf]
    %v22 = vld [vmem:[%s1 + $0x4] sm:$0xf]
    %v23 = vld [vmem:[%s0] sm:$0xf]
    %v24 = vld [vmem:[%s0 + $0x4] sm:$0xf]
    %27 = vrot.lane.b32.xlu0 %v21, 4
    %v28 = vpop.permute.xlu0 %27
    %29 = vrot.lane.b32.xlu0 %v22, 4
    %v30 = vpop.permute.xlu0 %29
    %vm33 = vcmask 31744
    %v34 = vsel %vm33, %v23, %v28
    %v35 = vsel %vm33, %v24, %v30
    %v36 = vld [vmem:[%s2] sm:$0xff]
    %v37 = vld [vmem:[%s3] sm:$0xff]
    %v38 = vld [vmem:[%s4] sm:$0xff]
    %v40 = vrot.slane %v34, 4
    %41 = vrot.lane.b32.xlu0 %v40, 126
    %v42 = vpop.permute.xlu0 %41
    %44 = vrot.lane.b32.xlu0 %v34, 124
    %v45 = vpop.permute.xlu0 %44
    %vm46 = vcmask 1043456
    %v47 = vsel %vm46, %v34, %v42
    %vm48 = vcmask 97280
    %v50 = vsel %vm48, %v36, 0
    %v52 = vsel %vm46, %v45, 0
    %54 = vmatpush.msra.mxu0 0.0
    %55 = vmatpush.msra.mxu0 0.0
    %56 = vmatpush.msra.mxu0 0.0
    %57 = vmatpush.msra.mxu0 0.0
    %58 = vmatpush.msra.mxu0 0.0
    %59 = vmatpush.msra.mxu0 0.0
    %60 = vmatpush.msra.mxu0 0.0
    %61 = vmatpush.msra.mxu0 0.0
    %62 = vmatpush.msra.mxu0 0.0
    %63 = vmatpush.msra.mxu0 0.0
    %64 = vmatpush.msra.mxu0 0.0
    %65 = vmatpush.msra.mxu0 0.0
    %66 = vmatpush.msra.mxu0 0.0
    %67 = vmatpush.msra.mxu0 0.0
    %68 = vmatpush.msra.mxu0 %v52
    %69 = vmatpush.msra.mxu0 %v47
    %70 = vmatmul.f32.gmra.mxu0 %v50
    %v71 = vpop.f32.mrf.mxu0
    %v72 = vadd.f32 0.0, %v71
    %73 = vdwg.mxu0
    %75 = vset.pattern.permute.xlu0 0
    %76 = vperm.xlu0 %75, %v37
    %v77 = vpop.permute.xlu0 %76
    %v79 = vmul.f32 %v72, %v77
    %81 = vset.pattern.permute.xlu0 0
    %82 = vperm.xlu0 %81, %v38
    %v83 = vpop.permute.xlu0 %82
    %v85 = vadd.f32 %v79, %v83
    %v86 = vmax.f32 %v85, 0.0
    %vm87 = vcmask 130048
    %88 = vst.msk [vmem:[#allocation2] sm:$0xff] %vm87, %v86
    %v90 = vrot.slane %v35, 4
    %91 = vrot.lane.b32.xlu0 %v90, 126
    %v92 = vpop.permute.xlu0 %91
    %94 = vrot.lane.b32.xlu0 %v35, 124
    %v95 = vpop.permute.xlu0 %94
    %v96 = vsel %vm46, %v35, %v92
    %v97 = vsel %vm46, %v95, 0
    %99 = vmatpush.msra.mxu0 0.0
    %100 = vmatpush.msra.mxu0 0.0
    %101 = vmatpush.msra.mxu0 0.0
    %102 = vmatpush.msra.mxu0 0.0
    %103 = vmatpush.msra.mxu0 0.0
    %104 = vmatpush.msra.mxu0 0.0
    %105 = vmatpush.msra.mxu0 0.0
    %106 = vmatpush.msra.mxu0 0.0
    %107 = vmatpush.msra.mxu0 0.0
    %108 = vmatpush.msra.mxu0 0.0
    %109 = vmatpush.msra.mxu0 0.0
    %110 = vmatpush.msra.mxu0 0.0
    %111 = vmatpush.msra.mxu0 0.0
    %112 = vmatpush.msra.mxu0 0.0
    %113 = vmatpush.msra.mxu0 %v97
    %114 = vmatpush.msra.mxu0 %v96
    %115 = vmatmul.f32.gmra.mxu0 %v50
    %v116 = vpop.f32.mrf.mxu0
    %v117 = vadd.f32 0.0, %v116
    %118 = vdwg.mxu0
    %v119 = vmul.f32 %v117, %v77
    %v120 = vadd.f32 %v119, %v83
    %v121 = vmax.f32 %v120, 0.0
    %s122 = scalar_lea.vmem [#allocation2], 8
    %123 = vst.msk [vmem:[%s122] sm:$0xff] %vm87, %v121
    // Predicated region
    $region22: #{tcn_block.3} parent=1 // pred_check
      _
    $region23: #{tcn_block.3} parent=1 // pred_check_branch
      %125 = sbr.rel (0) target = $region25
    $region24: #{tcn_block.3} parent=1 // pred_region
      %127 = vsyncadd [#allocation3], 0
      %s128 = sshll.u32 [#allocation2], 4
      %s129 = int_to_ptr.vmem [resolvable:$true] %s128
      %s130 = sshll.u32 %s5, 4
      %s131 = int_to_ptr.hbm [resolvable:$true] %s130
      %136 = dma.vmem_to_hbm [thread:$0]  %s129, 256, %s131, [#allocation3], 128, 128, 8
    $region25: #{tcn_block.3} parent=1 // pred_fallthru
      _
    // Predicated region
    $region26: #{tcn_block.3} parent=1 // pred_check
      _
    $region27: #{tcn_block.3} parent=1 // pred_check_branch
      %138 = sbr.rel (0) target = $region29
    $region28: #{tcn_block.3} parent=1 // pred_region
      %140 = dma.done [#allocation3], 256
    $region29: #{tcn_block.3} parent=1 // pred_fallthru
      _
    %141 = vsyncpa [#allocation3], 1

</llo_original>
